<compile_context>
chip_gen: v7x
topology: tpu7x:2x2x1
jax: 0.10.0
libtpu: 0.0.40
codegen_flags: <defaults>
</compile_context>

<pallas_src>
import jax
import jax.numpy as jnp
from jax.experimental import pallas as pl
from jax.experimental.pallas import tpu as pltpu


def _round_up(v, m):
    return ((v + m - 1) // m) * m


_SLAB_KEYS = ("w1", "w2", "we_eff", "wd1", "wd2", "wf_gd",
              "b1", "b2", "be", "bd1", "bd2", "bf_eff")


def _slab_layout(C, H, E):
    """Static, 8-aligned row offsets for every block packed into the param slab."""
    rows = {
        "w1": C, "w2": H, "we_eff": 2 * H, "wd1": 1, "wd2": 8,
        "wf_gd": E + 8,
        "b1": 1, "b2": 1, "be": 1, "bd1": 1, "bd2": 1, "bf_eff": 1,
    }
    offs, off = {}, 0
    for k in _SLAB_KEYS:
        offs[k] = off
        off += _round_up(rows[k], 8)
    width = max(H, E, 8)
    return offs, off, width


def _pack_slab(params, bf_eff, C, H, E, inv_n):
    """Pack every weight/bias the kernel needs into one [rows, width] f32 slab."""
    offs, total_rows, width = _slab_layout(C, H, E)
    we = params["we"].astype(jnp.float32)
    # Fold the mean-pool rows into the sum-pool rows (mean = inv_n * sum), so the
    # kernel only needs a single [1, 2H] @ [2H, E] dot for the embedding layer.
    we_eff = jnp.concatenate([we[H:2 * H] + inv_n * we[0:H], we[2 * H:3 * H]], axis=0)
    blocks = {
        "w1": params["w1"], "w2": params["w2"], "we_eff": we_eff,
        "wd1": params["wd1"], "wd2": params["wd2"],
        "wf_gd": params["wf"][0:E + 8, :],
        "b1": params["b1"], "b2": params["b2"], "be": params["be"],
        "bd1": params["bd1"], "bd2": params["bd2"], "bf_eff": bf_eff,
    }
    slab = jnp.zeros((total_rows, width), jnp.float32)
    for k in _SLAB_KEYS:
        arr = blocks[k].astype(jnp.float32)
        r, c = arr.shape
        slab = slab.at[offs[k]:offs[k] + r, 0:c].set(arr)
    return slab, offs


def _make_kernel(N, C, H, E, Ed, offs):
    ow1, ow2, owe = offs["w1"], offs["w2"], offs["we_eff"]
    owd1, owd2, owf = offs["wd1"], offs["wd2"], offs["wf_gd"]
    ob1, ob2, obe = offs["b1"], offs["b2"], offs["be"]
    obd1, obd2, obf = offs["bd1"], offs["bd2"], offs["bf_eff"]
    inv_n = 1.0 / N

    def kernel(nd_ref, src_ref, dst_ref, slab_ref, out_ref):
        f32 = jnp.float32
        bf16 = jnp.bfloat16

        nd = nd_ref[...]                       # [N, C + 1]
        X = nd[:, 0:C]                         # [N, C] node features
        d = nd[:, C:C + 1]                     # [N, 1] out-degree

        # --- Build adjacency in VMEM (never round-trips HBM) ------------------
        # src one-hot [Ed, N]: compare lane-index iota against src ids (padded
        # edges hold -1 and match no node -> contribute nothing).
        lane_n = jax.lax.broadcasted_iota(jnp.int32, (Ed, N), 1)
        src_oh = jnp.where(src_ref[...] == lane_n, 1.0, 0.0).astype(bf16)
        # dst one-hot already transposed [N, Ed]: sublane-index iota vs dst ids.
        sub_n = jax.lax.broadcasted_iota(jnp.int32, (N, Ed), 0)
        dst_oh_t = jnp.where(dst_ref[...] == sub_n, 1.0, 0.0).astype(bf16)
        # A[t, s] = number of edges s -> t, via one bf16 MXU dot (f32 accumulate).
        A = jnp.dot(dst_oh_t, src_oh, preferred_element_type=f32)   # [N, N]

        # Fused gcn_norm (with self loops): A_hat @ v == dinv * ((A + I) @ (dinv*v)).
        deg = jnp.sum(A, axis=1, keepdims=True) + 1.0                # XLU row-sum
        dinv = jax.lax.rsqrt(deg)                                    # EUP
        a_bf = A.astype(bf16)   # small integer counts -> exact in bf16
        # TODO(synk): on v7x, an fp8 (e4m3) adjacency would halve VMEM again and
        # raise MXU throughput when edge multiplicities are known to be <= 16.

        def gcn_prop(v):
            u = dinv * v
            return dinv * (jnp.dot(a_bf, u.astype(bf16),
                                   preferred_element_type=f32) + u)

        # --- GCNConv 1 + ReLU ---
        w1 = slab_ref[ow1:ow1 + C, 0:H]
        b1 = slab_ref[ob1:ob1 + 1, 0:H]
        h = jnp.dot(X, w1, preferred_element_type=f32)
        h = jnp.maximum(gcn_prop(h) + b1, 0.0)

        # --- GCNConv 2 + ReLU ---
        w2 = slab_ref[ow2:ow2 + H, 0:H]
        b2 = slab_ref[ob2:ob2 + 1, 0:H]
        h = jnp.dot(h, w2, preferred_element_type=f32)
        h = jnp.maximum(gcn_prop(h) + b2, 0.0)

        # --- global pooling (batch == zeros); mean rows pre-folded into sum rows ---
        pooled_sum = jnp.sum(h, axis=0, keepdims=True)               # [1, H]
        pooled_max = jnp.max(h, axis=0, keepdims=True)               # [1, H]
        pooled = jnp.concatenate([pooled_sum, pooled_max], axis=1)   # [1, 2H]
        ge = jnp.maximum(
            jnp.dot(pooled, slab_ref[owe:owe + 2 * H, 0:E],
                    preferred_element_type=f32)
            + slab_ref[obe:obe + 1, 0:E], 0.0)                       # [1, E]

        # --- node_degree_embedding MLP: reduce first, then [1,8]@[8,8] ---
        wd1 = slab_ref[owd1:owd1 + 1, 0:8]
        bd1 = slab_ref[obd1:obd1 + 1, 0:8]
        de = jnp.maximum(d * wd1 + bd1, 0.0)                         # [N, 8]
        dpool = jnp.sum(de, axis=0, keepdims=True) * inv_n           # [1, 8]
        dme = (jnp.dot(dpool, slab_ref[owd2:owd2 + 8, 0:8],
                       preferred_element_type=f32)
               + slab_ref[obd2:obd2 + 1, 0:8])                       # [1, 8]

        # --- final projection (graph-stats branch pre-folded into bf_eff) ---
        comb = jnp.concatenate([ge, dme], axis=1)                    # [1, E + 8]
        out_ref[...] = (jnp.dot(comb, slab_ref[owf:owf + E + 8, 0:E],
                                preferred_element_type=f32)
                        + slab_ref[obf:obf + 1, 0:E])                # [1, E]

    return kernel


def init_params(key, in_channels, hidden_channels=64, embedding_size=64):
    ks = jax.random.split(key, 20)

    def w(k, i, o):
        return (0.1 * jax.random.normal(k, (i, o))).astype(jnp.float32)

    def b(k, o):
        return (0.01 * jax.random.normal(k, (1, o))).astype(jnp.float32)

    H, E = hidden_channels, embedding_size
    return dict(
        w1=w(ks[0], in_channels, H), b1=b(ks[1], H),
        w2=w(ks[2], H, H),           b2=b(ks[3], H),
        we=w(ks[4], 3 * H, E),       be=b(ks[5], E),
        wd1=w(ks[6], 1, 8),          bd1=b(ks[7], 8),
        wd2=w(ks[8], 8, 8),          bd2=b(ks[9], 8),
        ws1=w(ks[10], 5, 16),        bs1=b(ks[11], 16),
        ws2=w(ks[12], 16, 16),       bs2=b(ks[13], 16),
        wf=w(ks[14], E + 8 + 16, E), bf=b(ks[15], E),
    )


def graph_observation_extractor(x, edge_index, params):
    """x: [N, C] float32, edge_index: [2, num_edges] int32 -> [embedding_size]."""
    N, C = x.shape
    num_edges = edge_index.shape[1]
    H = params["w1"].shape[1]
    E = params["we"].shape[1]
    f32 = jnp.float32
    inv_n = 1.0 / N

    src = edge_index[0].astype(jnp.int32)
    dst = edge_index[1].astype(jnp.int32)

    # Out-degree (torch_geometric.utils.degree(edge_index[0])) -- tiny O(N) scatter.
    node_degrees = jnp.zeros((N,), f32).at[src].add(1.0).reshape(N, 1)
    node_data = jnp.concatenate([x.astype(f32), node_degrees], axis=1)  # [N, C+1]

    # Edge ids padded to a lane-friendly length with -1 (matches no node).
    ed_pad = max(128, _round_up(num_edges, 128))
    pad = ed_pad - num_edges
    src_col = jnp.pad(src, (0, pad), constant_values=-1).reshape(ed_pad, 1)
    dst_row = jnp.pad(dst, (0, pad), constant_values=-1).reshape(1, ed_pad)

    # Graph statistics are pure static scalars -> run the 5->16->16 MLP here and
    # fold its final-projection contribution into an effective final bias.
    graph_size = N / 100.0
    edge_count = num_edges / 2.0
    max_edges = N * (N - 1) / 2.0
    edge_density = edge_count / max_edges
    avg_clustering = edge_density
    avg_path_length = 1.0 / (edge_density + 1e-6)
    connected_components = 1.0
    gs = jnp.array([[graph_size, edge_density, avg_clustering,
                     avg_path_length, connected_components]], f32)
    gse = jnp.maximum(gs @ params["ws1"] + params["bs1"], 0.0)
    gse = gse @ params["ws2"] + params["bs2"]              # [1, 16]
    bf_eff = params["bf"] + gse @ params["wf"][E + 8:E + 24, :]

    slab, offs = _pack_slab(params, bf_eff, C, H, E, inv_n)

    # Generation-aware VMEM budget: inputs + in-kernel temporaries + headroom,
    # capped at ~80% of physical VMEM (~51 MiB on v7x, ~102 MiB on v5e/v6e).
    def vbytes(r, c, itemsize=4):
        return _round_up(r, 8) * _round_up(c, 128) * itemsize

    needed = (vbytes(N, C + 1) + vbytes(ed_pad, 1) + vbytes(1, ed_pad)
              + vbytes(slab.shape[0], slab.shape[1])
              + 2 * vbytes(ed_pad, N, 2)             # one-hot operands (bf16)
              + vbytes(N, N, 4) + vbytes(N, N, 2)    # adjacency f32 + bf16
              + 8 * vbytes(N, H, 4)                  # [N,H] f32 temporaries
              + (8 << 20))                           # Mosaic internal scratch
    try:
        cap = int(pltpu.get_tpu_info().vmem_capacity_bytes)
    except Exception:
        cap = 128 << 20
    vmem_limit = int(min(int(0.8 * cap), max(32 << 20, needed)))
    # TODO(synk): for N beyond a few thousand nodes (when the [N,N] adjacency no
    # longer fits VMEM), switch to a row-block grid that streams (tm, N) slices of
    # A with a "parallel" leading axis (per-core partial sum/max pools, max init
    # to -inf, padded rows masked) so v7x's second TensorCore is used as well.

    vmem = pl.BlockSpec(memory_space=pltpu.MemorySpace.VMEM)
    out = pl.pallas_call(
        _make_kernel(N, C, H, E, ed_pad, offs),
        out_shape=jax.ShapeDtypeStruct((1, E), f32),
        in_specs=[vmem, vmem, vmem, vmem],
        out_specs=vmem,
        compiler_params=pltpu.CompilerParams(vmem_limit_bytes=vmem_limit),
    )(node_data, src_col, dst_row, slab)
    return out.reshape(-1)


def _reference(x, edge_index, params):
    """Pure-JAX reference mirroring the original PyTorch forward."""
    N, C = x.shape
    num_edges = edge_index.shape[1]
    E = params["we"].shape[1]
    src, dst = edge_index[0], edge_index[1]

    A = jnp.zeros((N, N), jnp.float32).at[dst, src].add(1.0) + jnp.eye(N, dtype=jnp.float32)
    deg = jnp.sum(A, axis=1)
    dinv = jax.lax.rsqrt(deg)
    a_hat = A * dinv[:, None] * dinv[None, :]

    h = jnp.maximum(a_hat @ (x @ params["w1"]) + params["b1"], 0.0)
    h = jnp.maximum(a_hat @ (h @ params["w2"]) + params["b2"], 0.0)
    pooled = jnp.concatenate([h.mean(0, keepdims=True), h.sum(0, keepdims=True),
                              h.max(0, keepdims=True)], axis=1)
    ge = jnp.maximum(pooled @ params["we"] + params["be"], 0.0)

    d = jnp.zeros((N,), jnp.float32).at[src].add(1.0).reshape(N, 1)
    de = jnp.maximum(d @ params["wd1"] + params["bd1"], 0.0) @ params["wd2"] + params["bd2"]
    dme = de.mean(0, keepdims=True)

    edge_density = (num_edges / 2.0) / (N * (N - 1) / 2.0)
    gs = jnp.array([[N / 100.0, edge_density, edge_density,
                     1.0 / (edge_density + 1e-6), 1.0]], jnp.float32)
    gse = jnp.maximum(gs @ params["ws1"] + params["bs1"], 0.0) @ params["ws2"] + params["bs2"]

    combined = jnp.concatenate([ge, dme, gse], axis=1)
    return (combined @ params["wf"] + params["bf"]).reshape(-1)


if __name__ == "__main__":
    key = jax.random.PRNGKey(0)
    kx, kp = jax.random.split(key)

    # small shapes: 16 nodes, 4 input channels, hidden=32, embedding=32
    N, C, H, E = 16, 4, 32, 32

    x = jax.random.normal(kx, (N, C), jnp.float32)

    # deterministic ring graph, both directions (32 directed edges)
    idx = jnp.arange(N, dtype=jnp.int32)
    src = jnp.concatenate([idx, (idx + 1) % N])
    dst = jnp.concatenate([(idx + 1) % N, idx])
    edge_index = jnp.stack([src, dst])

    params = init_params(kp, C, hidden_channels=H, embedding_size=E)

    obs = jax.jit(graph_observation_extractor)(x, edge_index, params)
    jax.block_until_ready(obs)
    assert obs.shape == (E,)
    assert bool(jnp.all(jnp.isfinite(obs)))

    ref = _reference(x, edge_index, params)
    # Propagation matmuls use bf16 operands (f32 accumulation) -> looser tolerance.
    assert bool(jnp.allclose(obs, ref, rtol=2e-2, atol=2e-2))
    print("KERNEL_OK")
</pallas_src>

<mosaic_0001>
module attributes {stable_mosaic.version = 11 : i64} {
  func.func private @main(%arg0: i32) attributes {dimension_semantics = [#tpu.dimension_semantics<core_parallel>], iteration_bounds = array<i64: 2>, tpu.core_type = #tpu.core_type<sc_scalar_subcore>, window_params = []} {
    return
  }
}

module attributes {stable_mosaic.version = 11 : i64} {
  func.func private @main(%arg0: i32) attributes {dimension_semantics = [#tpu.dimension_semantics<core_parallel>], iteration_bounds = array<i64: 2>, tpu.core_type = #tpu.core_type<sc_scalar_subcore>, window_params = []} {
    return
  }
}

module attributes {stable_mosaic.version = 11 : i64} {
  func.func @kernel(%arg0: memref<16x5xf32, #tpu.memory_space<vmem>>, %arg1: memref<128x1xi32, #tpu.memory_space<vmem>>, %arg2: memref<1x128xi32, #tpu.memory_space<vmem>>, %arg3: memref<208x32xf32, #tpu.memory_space<vmem>>, %arg4: memref<1x32xf32, #tpu.memory_space<vmem>>) attributes {dimension_semantics = [], scalar_prefetch = 0 : i64, scratch_operands = 0 : i64, tpu.core_type = #tpu.core_type<tc>} {
    %c0 = arith.constant 0 : index
    %c0_0 = arith.constant 0 : index
    %0 = vector.load %arg0[%c0, %c0_0] : memref<16x5xf32, #tpu.memory_space<vmem>>, vector<16x5xf32>
    %1 = vector.extract_strided_slice %0 {offsets = [0, 0], sizes = [16, 4], strides = [1, 1]} : vector<16x5xf32> to vector<16x4xf32>
    %2 = vector.extract_strided_slice %0 {offsets = [0, 4], sizes = [16, 1], strides = [1, 1]} : vector<16x5xf32> to vector<16x1xf32>
    %3 = tpu.iota {dimensions = array<i32: 1>} : vector<128x16xi32>
    %c0_1 = arith.constant 0 : index
    %c0_2 = arith.constant 0 : index
    %4 = vector.load %arg1[%c0_1, %c0_2] : memref<128x1xi32, #tpu.memory_space<vmem>>, vector<128x1xi32>
    %5 = vector.broadcast %4 : vector<128x1xi32> to vector<128x16xi32>
    %6 = arith.cmpi eq, %5, %3 : vector<128x16xi32>
    %cst = arith.constant 1.000000e+00 : f32
    %cst_3 = arith.constant 0.000000e+00 : f32
    %7 = vector.broadcast %cst : f32 to vector<128x16xf32>
    %8 = vector.broadcast %cst_3 : f32 to vector<128x16xf32>
    %9 = arith.select %6, %7, %8 : vector<128x16xi1>, vector<128x16xf32>
    %10 = arith.truncf %9 : vector<128x16xf32> to vector<128x16xbf16>
    %11 = tpu.iota {dimensions = array<i32: 0>} : vector<16x128xi32>
    %c0_4 = arith.constant 0 : index
    %c0_5 = arith.constant 0 : index
    %12 = vector.load %arg2[%c0_4, %c0_5] : memref<1x128xi32, #tpu.memory_space<vmem>>, vector<1x128xi32>
    %13 = vector.broadcast %12 : vector<1x128xi32> to vector<16x128xi32>
    %14 = arith.cmpi eq, %13, %11 : vector<16x128xi32>
    %cst_6 = arith.constant 1.000000e+00 : f32
    %cst_7 = arith.constant 0.000000e+00 : f32
    %15 = vector.broadcast %cst_6 : f32 to vector<16x128xf32>
    %16 = vector.broadcast %cst_7 : f32 to vector<16x128xf32>
    %17 = arith.select %14, %15, %16 : vector<16x128xi1>, vector<16x128xf32>
    %18 = arith.truncf %17 : vector<16x128xf32> to vector<16x128xbf16>
    %cst_8 = arith.constant dense<0.000000e+00> : vector<16x16xf32>
    %19 = tpu.matmul %18, %10, %cst_8 {dimension_numbers = #tpu.dot_dimension_numbers<[1], [0], [0], [1], [0, 0, 1, 1], [], []>} : vector<16x128xbf16>, vector<128x16xbf16>, vector<16x16xf32> -> vector<16x16xf32>
    %cst_9 = arith.constant dense<0.000000e+00> : vector<16xf32>
    %20 = vector.multi_reduction <add>, %19, %cst_9 [1] : vector<16x16xf32> to vector<16xf32>
    %21 = vector.shape_cast %20 : vector<16xf32> to vector<16x1xf32>
    %cst_10 = arith.constant 1.000000e+00 : f32
    %22 = vector.broadcast %cst_10 : f32 to vector<16x1xf32>
    %23 = arith.addf %21, %22 : vector<16x1xf32>
    %24 = math.rsqrt %23 : vector<16x1xf32>
    %25 = arith.truncf %19 : vector<16x16xf32> to vector<16x16xbf16>
    %c0_11 = arith.constant 0 : index
    %c0_12 = arith.constant 0 : index
    %26 = vector.load %arg3[%c0_11, %c0_12] : memref<208x32xf32, #tpu.memory_space<vmem>>, vector<4x32xf32>
    %c160 = arith.constant 160 : index
    %c0_13 = arith.constant 0 : index
    %27 = vector.load %arg3[%c160, %c0_13] : memref<208x32xf32, #tpu.memory_space<vmem>>, vector<1x32xf32>
    %cst_14 = arith.constant dense<0.000000e+00> : vector<16x32xf32>
    %28 = tpu.matmul %1, %26, %cst_14 {dimension_numbers = #tpu.dot_dimension_numbers<[1], [0], [0], [1], [0, 0, 1, 1], [], []>} : vector<16x4xf32>, vector<4x32xf32>, vector<16x32xf32> -> vector<16x32xf32>
    %29 = vector.broadcast %24 : vector<16x1xf32> to vector<16x32xf32>
    %30 = arith.mulf %29, %28 : vector<16x32xf32>
    %31 = arith.truncf %30 : vector<16x32xf32> to vector<16x32xbf16>
    %cst_15 = arith.constant dense<0.000000e+00> : vector<16x32xf32>
    %32 = tpu.matmul %25, %31, %cst_15 {dimension_numbers = #tpu.dot_dimension_numbers<[1], [0], [0], [1], [0, 0, 1, 1], [], []>} : vector<16x16xbf16>, vector<16x32xbf16>, vector<16x32xf32> -> vector<16x32xf32>
    %33 = arith.addf %32, %30 : vector<16x32xf32>
    %34 = vector.broadcast %24 : vector<16x1xf32> to vector<16x32xf32>
    %35 = arith.mulf %34, %33 : vector<16x32xf32>
    %36 = vector.broadcast %27 : vector<1x32xf32> to vector<16x32xf32>
    %37 = arith.addf %35, %36 : vector<16x32xf32>
    %cst_16 = arith.constant 0.000000e+00 : f32
    %38 = vector.broadcast %cst_16 : f32 to vector<16x32xf32>
    %39 = arith.maximumf %37, %38 : vector<16x32xf32>
    %c8 = arith.constant 8 : index
    %c0_17 = arith.constant 0 : index
    %40 = vector.load %arg3[%c8, %c0_17] : memref<208x32xf32, #tpu.memory_space<vmem>>, vector<32x32xf32>
    %c168 = arith.constant 168 : index
    %c0_18 = arith.constant 0 : index
    %41 = vector.load %arg3[%c168, %c0_18] : memref<208x32xf32, #tpu.memory_space<vmem>>, vector<1x32xf32>
    %cst_19 = arith.constant dense<0.000000e+00> : vector<16x32xf32>
    %42 = tpu.matmul %39, %40, %cst_19 {dimension_numbers = #tpu.dot_dimension_numbers<[1], [0], [0], [1], [0, 0, 1, 1], [], []>} : vector<16x32xf32>, vector<32x32xf32>, vector<16x32xf32> -> vector<16x32xf32>
    %43 = vector.broadcast %24 : vector<16x1xf32> to vector<16x32xf32>
    %44 = arith.mulf %43, %42 : vector<16x32xf32>
    %45 = arith.truncf %44 : vector<16x32xf32> to vector<16x32xbf16>
    %cst_20 = arith.constant dense<0.000000e+00> : vector<16x32xf32>
    %46 = tpu.matmul %25, %45, %cst_20 {dimension_numbers = #tpu.dot_dimension_numbers<[1], [0], [0], [1], [0, 0, 1, 1], [], []>} : vector<16x16xbf16>, vector<16x32xbf16>, vector<16x32xf32> -> vector<16x32xf32>
    %47 = arith.addf %46, %44 : vector<16x32xf32>
    %48 = vector.broadcast %24 : vector<16x1xf32> to vector<16x32xf32>
    %49 = arith.mulf %48, %47 : vector<16x32xf32>
    %50 = vector.broadcast %41 : vector<1x32xf32> to vector<16x32xf32>
    %51 = arith.addf %49, %50 : vector<16x32xf32>
    %cst_21 = arith.constant 0.000000e+00 : f32
    %52 = vector.broadcast %cst_21 : f32 to vector<16x32xf32>
    %53 = arith.maximumf %51, %52 : vector<16x32xf32>
    %cst_22 = arith.constant dense<0.000000e+00> : vector<32xf32>
    %54 = vector.multi_reduction <add>, %53, %cst_22 [0] : vector<16x32xf32> to vector<32xf32>
    %55 = vector.shape_cast %54 : vector<32xf32> to vector<1x32xf32>
    %cst_23 = arith.constant dense<0xFF800000> : vector<32xf32>
    %56 = vector.multi_reduction <maximumf>, %53, %cst_23 [0] : vector<16x32xf32> to vector<32xf32>
    %57 = vector.shape_cast %56 : vector<32xf32> to vector<1x32xf32>
    %58 = tpu.concatenate %55, %57 in 1 : vector<1x32xf32>, vector<1x32xf32> -> vector<1x64xf32>
    %c40 = arith.constant 40 : index
    %c0_24 = arith.constant 0 : index
    %59 = vector.load %arg3[%c40, %c0_24] : memref<208x32xf32, #tpu.memory_space<vmem>>, vector<64x32xf32>
    %cst_25 = arith.constant dense<0.000000e+00> : vector<1x32xf32>
    %60 = tpu.matmul %58, %59, %cst_25 {dimension_numbers = #tpu.dot_dimension_numbers<[1], [0], [0], [1], [0, 0, 1, 1], [], []>} : vector<1x64xf32>, vector<64x32xf32>, vector<1x32xf32> -> vector<1x32xf32>
    %c176 = arith.constant 176 : index
    %c0_26 = arith.constant 0 : index
    %61 = vector.load %arg3[%c176, %c0_26] : memref<208x32xf32, #tpu.memory_space<vmem>>, vector<1x32xf32>
    %62 = arith.addf %60, %61 : vector<1x32xf32>
    %cst_27 = arith.constant 0.000000e+00 : f32
    %63 = vector.broadcast %cst_27 : f32 to vector<1x32xf32>
    %64 = arith.maximumf %62, %63 : vector<1x32xf32>
    %c104 = arith.constant 104 : index
    %c0_28 = arith.constant 0 : index
    %65 = vector.load %arg3[%c104, %c0_28] : memref<208x32xf32, #tpu.memory_space<vmem>>, vector<1x8xf32>
    %c184 = arith.constant 184 : index
    %c0_29 = arith.constant 0 : index
    %66 = vector.load %arg3[%c184, %c0_29] : memref<208x32xf32, #tpu.memory_space<vmem>>, vector<1x8xf32>
    %67 = vector.broadcast %2 : vector<16x1xf32> to vector<16x8xf32>
    %68 = vector.broadcast %65 : vector<1x8xf32> to vector<16x8xf32>
    %69 = arith.mulf %67, %68 : vector<16x8xf32>
    %70 = vector.broadcast %66 : vector<1x8xf32> to vector<16x8xf32>
    %71 = arith.addf %69, %70 : vector<16x8xf32>
    %cst_30 = arith.constant 0.000000e+00 : f32
    %72 = vector.broadcast %cst_30 : f32 to vector<16x8xf32>
    %73 = arith.maximumf %71, %72 : vector<16x8xf32>
    %cst_31 = arith.constant dense<0.000000e+00> : vector<8xf32>
    %74 = vector.multi_reduction <add>, %73, %cst_31 [0] : vector<16x8xf32> to vector<8xf32>
    %75 = vector.shape_cast %74 : vector<8xf32> to vector<1x8xf32>
    %cst_32 = arith.constant 6.250000e-02 : f32
    %76 = vector.broadcast %cst_32 : f32 to vector<1x8xf32>
    %77 = arith.mulf %75, %76 : vector<1x8xf32>
    %c112 = arith.constant 112 : index
    %c0_33 = arith.constant 0 : index
    %78 = vector.load %arg3[%c112, %c0_33] : memref<208x32xf32, #tpu.memory_space<vmem>>, vector<8x8xf32>
    %cst_34 = arith.constant dense<0.000000e+00> : vector<1x8xf32>
    %79 = tpu.matmul %77, %78, %cst_34 {dimension_numbers = #tpu.dot_dimension_numbers<[1], [0], [0], [1], [0, 0, 1, 1], [], []>} : vector<1x8xf32>, vector<8x8xf32>, vector<1x8xf32> -> vector<1x8xf32>
    %c192 = arith.constant 192 : index
    %c0_35 = arith.constant 0 : index
    %80 = vector.load %arg3[%c192, %c0_35] : memref<208x32xf32, #tpu.memory_space<vmem>>, vector<1x8xf32>
    %81 = arith.addf %79, %80 : vector<1x8xf32>
    %82 = tpu.concatenate %64, %81 in 1 : vector<1x32xf32>, vector<1x8xf32> -> vector<1x40xf32>
    %c120 = arith.constant 120 : index
    %c0_36 = arith.constant 0 : index
    %83 = vector.load %arg3[%c120, %c0_36] : memref<208x32xf32, #tpu.memory_space<vmem>>, vector<40x32xf32>
    %cst_37 = arith.constant dense<0.000000e+00> : vector<1x32xf32>
    %84 = tpu.matmul %82, %83, %cst_37 {dimension_numbers = #tpu.dot_dimension_numbers<[1], [0], [0], [1], [0, 0, 1, 1], [], []>} : vector<1x40xf32>, vector<40x32xf32>, vector<1x32xf32> -> vector<1x32xf32>
    %c200 = arith.constant 200 : index
    %c0_38 = arith.constant 0 : index
    %85 = vector.load %arg3[%c200, %c0_38] : memref<208x32xf32, #tpu.memory_space<vmem>>, vector<1x32xf32>
    %86 = arith.addf %84, %85 : vector<1x32xf32>
    %c0_39 = arith.constant 0 : index
    %c0_40 = arith.constant 0 : index
    %87 = vector.load %arg4[%c0_39, %c0_40] : memref<1x32xf32, #tpu.memory_space<vmem>>, vector<1x32xf32>
    tpu.vector_store %arg4[%c0_39, %c0_40], %86 {strides = array<i32>} : memref<1x32xf32, #tpu.memory_space<vmem>>, vector<1x32xf32>,
    return
  }
}

</mosaic_0001>

<llo_original>
// kernel: graph_observation_extractor.1
$region0: #{graph_observation_extractor.1}
  #allocation0 [shape = 'u32[]', space=smem, size = 0x4, offset = 0x4, fixed_abs, tag = 'smem constant byte address 0x4 - core index']
  #allocation1 [shape = 'u32[144,128]{1,0:T(1,128)}', space=vmem, size = 0x12000, scoped, tag = 'internal scratch']
  %s0 = inlined_call_operand.vmem [shape: f32[16,5], index: 0, kind: input, shape index: {}]
  %s1 = inlined_call_operand.vmem [shape: s32[128,1], index: 1, kind: input, shape index: {}]
  %s2 = inlined_call_operand.vmem [shape: s32[1,128], index: 2, kind: input, shape index: {}]
  %s3 = inlined_call_operand.vmem [shape: f32[208,32], index: 3, kind: input, shape index: {}]
  %s4 = inlined_call_operand.hbm [shape: f32[1,32], index: 4, kind: output, shape index: {}]
  %s5 = sld [smem:[#allocation0]]
  $region26: #{graph_observation_extractor.1} parent=0
    _
  %s7 = ssub.s32 1, %s5
  %s8 = scalar_select 0, %s7, %s5
  $region1: #{graph_observation_extractor.1} parent=0
    #allocation2 [shape = 'u8[512]{0}', space=vmem, size = 0x400, scoped, tag = 'output window, operand 0, single buffered']
    #allocation3 [shape = 's32[1]{0}', space=sflag, size = 0x4, scoped, tag = 'scoped memory for graph_observation_extractor.1']
    %9 = vsyncpa [#allocation3], 0
    // Predicated region
    $region2: #{graph_observation_extractor.1} parent=1 // pred_check
      _
    $region3: #{graph_observation_extractor.1} parent=1 // pred_check_branch
      %11 = sbr.rel (0) target = $region5
    $region4: #{graph_observation_extractor.1} parent=1 // pred_region
      _
    $region5: #{graph_observation_extractor.1} parent=1 // pred_fallthru
      _
    // Predicated region
    $region6: #{graph_observation_extractor.1} parent=1 // pred_check
      _
    $region7: #{graph_observation_extractor.1} parent=1 // pred_check_branch
      %13 = sbr.rel (0) target = $region9
    $region8: #{graph_observation_extractor.1} parent=1 // pred_region
      _
    $region9: #{graph_observation_extractor.1} parent=1 // pred_fallthru
      _
    // Predicated region
    $region10: #{graph_observation_extractor.1} parent=1 // pred_check
      _
    $region11: #{graph_observation_extractor.1} parent=1 // pred_check_branch
      %15 = sbr.rel (0) target = $region13
    $region12: #{graph_observation_extractor.1} parent=1 // pred_region
      _
    $region13: #{graph_observation_extractor.1} parent=1 // pred_fallthru
      _
    // Predicated region
    $region14: #{graph_observation_extractor.1} parent=1 // pred_check
      _
    $region15: #{graph_observation_extractor.1} parent=1 // pred_check_branch
      %17 = sbr.rel (0) target = $region17
    $region16: #{graph_observation_extractor.1} parent=1 // pred_region
      _
    $region17: #{graph_observation_extractor.1} parent=1 // pred_fallthru
      _
    %v19 = vld [vmem:[%s0] sm:$0xff]
    %v20 = vld [vmem:[%s0 + $0x8] sm:$0xff]
    %v21 = vlaneseq
    %v22 = vand.u32 %v21, 127
    %v23 = vld [vmem:[%s1] sm:$0xff]
    %v24 = vld [vmem:[%s1 + $0x8] sm:$0xff]
    %v25 = vld [vmem:[%s1 + $0x10] sm:$0xff]
    %v26 = vld [vmem:[%s1 + $0x18] sm:$0xff]
    %v27 = vld [vmem:[%s1 + $0x20] sm:$0xff]
    %v28 = vld [vmem:[%s1 + $0x28] sm:$0xff]
    %v29 = vld [vmem:[%s1 + $0x30] sm:$0xff]
    %v30 = vld [vmem:[%s1 + $0x38] sm:$0xff]
    %v31 = vld [vmem:[%s1 + $0x40] sm:$0xff]
    %v32 = vld [vmem:[%s1 + $0x48] sm:$0xff]
    %v33 = vld [vmem:[%s1 + $0x50] sm:$0xff]
    %v34 = vld [vmem:[%s1 + $0x58] sm:$0xff]
    %v35 = vld [vmem:[%s1 + $0x60] sm:$0xff]
    %v36 = vld [vmem:[%s1 + $0x68] sm:$0xff]
    %v37 = vld [vmem:[%s1 + $0x70] sm:$0xff]
    %v38 = vld [vmem:[%s1 + $0x78] sm:$0xff]
    %39 = vset.pattern.permute.xlu0 0
    %40 = vperm.xlu0 %39, %v23
    %v41 = vpop.permute.xlu0 %40
    %42 = vset.pattern.permute.xlu0 0
    %43 = vperm.xlu0 %42, %v24
    %v44 = vpop.permute.xlu0 %43
    %45 = vset.pattern.permute.xlu0 0
    %46 = vperm.xlu0 %45, %v25
    %v47 = vpop.permute.xlu0 %46
    %48 = vset.pattern.permute.xlu0 0
    %49 = vperm.xlu0 %48, %v26
    %v50 = vpop.permute.xlu0 %49
    %51 = vset.pattern.permute.xlu0 0
    %52 = vperm.xlu0 %51, %v27
    %v53 = vpop.permute.xlu0 %52
    %54 = vset.pattern.permute.xlu0 0
    %55 = vperm.xlu0 %54, %v28
    %v56 = vpop.permute.xlu0 %55
    %57 = vset.pattern.permute.xlu0 0
    %58 = vperm.xlu0 %57, %v29
    %v59 = vpop.permute.xlu0 %58
    %60 = vset.pattern.permute.xlu0 0
    %61 = vperm.xlu0 %60, %v30
    %v62 = vpop.permute.xlu0 %61
    %63 = vset.pattern.permute.xlu0 0
    %64 = vperm.xlu0 %63, %v31
    %v65 = vpop.permute.xlu0 %64
    %66 = vset.pattern.permute.xlu0 0
    %67 = vperm.xlu0 %66, %v32
    %v68 = vpop.permute.xlu0 %67
    %69 = vset.pattern.permute.xlu0 0
    %70 = vperm.xlu0 %69, %v33
    %v71 = vpop.permute.xlu0 %70
    %72 = vset.pattern.permute.xlu0 0
    %73 = vperm.xlu0 %72, %v34
    %v74 = vpop.permute.xlu0 %73
    %75 = vset.pattern.permute.xlu0 0
    %76 = vperm.xlu0 %75, %v35
    %v77 = vpop.permute.xlu0 %76
    %78 = vset.pattern.permute.xlu0 0
    %79 = vperm.xlu0 %78, %v36
    %v80 = vpop.permute.xlu0 %79
    %81 = vset.pattern.permute.xlu0 0
    %82 = vperm.xlu0 %81, %v37
    %v83 = vpop.permute.xlu0 %82
    %84 = vset.pattern.permute.xlu0 0
    %85 = vperm.xlu0 %84, %v38
    %v86 = vpop.permute.xlu0 %85
    %vm87 = vcmp.eq.s32.totalorder %v41, %v22
    %vm88 = vcmp.eq.s32.totalorder %v44, %v22
    %vm89 = vcmp.eq.s32.totalorder %v47, %v22
    %vm90 = vcmp.eq.s32.totalorder %v50, %v22
    %vm91 = vcmp.eq.s32.totalorder %v53, %v22
    %vm92 = vcmp.eq.s32.totalorder %v56, %v22
    %vm93 = vcmp.eq.s32.totalorder %v59, %v22
    %vm94 = vcmp.eq.s32.totalorder %v62, %v22
    %vm95 = vcmp.eq.s32.totalorder %v65, %v22
    %vm96 = vcmp.eq.s32.totalorder %v68, %v22
    %vm97 = vcmp.eq.s32.totalorder %v71, %v22
    %vm98 = vcmp.eq.s32.totalorder %v74, %v22
    %vm99 = vcmp.eq.s32.totalorder %v77, %v22
    %vm100 = vcmp.eq.s32.totalorder %v80, %v22
    %vm101 = vcmp.eq.s32.totalorder %v83, %v22
    %vm102 = vcmp.eq.s32.totalorder %v86, %v22
    %v103 = vsel %vm87, 1.0, 0.0
    %v104 = vsel %vm88, 1.0, 0.0
    %v105 = vsel %vm89, 1.0, 0.0
    %v106 = vsel %vm90, 1.0, 0.0
    %v107 = vsel %vm91, 1.0, 0.0
    %v108 = vsel %vm92, 1.0, 0.0
    %v109 = vsel %vm93, 1.0, 0.0
    %v110 = vsel %vm94, 1.0, 0.0
    %v111 = vsel %vm95, 1.0, 0.0
    %v112 = vsel %vm96, 1.0, 0.0
    %v113 = vsel %vm97, 1.0, 0.0
    %v114 = vsel %vm98, 1.0, 0.0
    %v115 = vsel %vm99, 1.0, 0.0
    %v116 = vsel %vm100, 1.0, 0.0
    %v117 = vsel %vm101, 1.0, 0.0
    %v118 = vsel %vm102, 1.0, 0.0
    %v119 = vpack.c.bf16 %v104, %v103
    %v120 = vpack.c.bf16 %v106, %v105
    %v121 = vpack.c.bf16 %v108, %v107
    %v122 = vpack.c.bf16 %v110, %v109
    %v123 = vpack.c.bf16 %v112, %v111
    %v124 = vpack.c.bf16 %v114, %v113
    %v125 = vpack.c.bf16 %v116, %v115
    %v126 = vpack.c.bf16 %v118, %v117
    %v127 = vlaneseq
    %v128 = vshrl.u32 %v127, 7
    %v129 = vadd.s32 %v128, 8
    %v130 = vld [vmem:[%s2] sm:$0x1]
    %v131 = vlaneseq
    %v132 = vshrl.u32 %v131, 7
    %v133 = vsub.s32 0, %v132
    %v134 = vrot.slane %v130, %v133
    %vm135 = vcmp.eq.s32.totalorder %v134, %v128
    %vm136 = vcmp.eq.s32.totalorder %v134, %v129
    %v137 = vsel %vm135, 1.0, 0.0
    %v138 = vsel %vm136, 1.0, 0.0
    %v139 = vpack.c.bf16 %v138, %v137
    %140 = vmatprep.subr.bf16.mxu0 0
    %141 = vmatpush1.bf16.msra.mxu0 %v119
    %142 = vmatprep.subr.bf16.mxu0 0
    %143 = vmatpush1.bf16.msra.mxu0 %v120
    %144 = vmatprep.subr.bf16.mxu0 0
    %145 = vmatpush1.bf16.msra.mxu0 %v121
    %146 = vmatprep.subr.bf16.mxu0 0
    %147 = vmatpush1.bf16.msra.mxu0 %v122
    %148 = vmatprep.subr.bf16.mxu0 0
    %149 = vmatpush1.bf16.msra.mxu0 %v123
    %150 = vmatprep.subr.bf16.mxu0 0
    %151 = vmatpush1.bf16.msra.mxu0 %v124
    %152 = vmatprep.subr.bf16.mxu0 0
    %153 = vmatpush1.bf16.msra.mxu0 %v125
    %154 = vmatprep.subr.bf16.mxu0 0
    %155 = vmatpush1.bf16.msra.mxu0 %v126
    %156 = vmatprep.subr.bf16.mxu0 0
    %157 = vmatpush1.bf16.msra.mxu0 0
    %158 = vmatprep.subr.bf16.mxu0 0
    %159 = vmatpush1.bf16.msra.mxu0 0
    %160 = vmatprep.subr.bf16.mxu0 0
    %161 = vmatpush1.bf16.msra.mxu0 0
    %162 = vmatprep.subr.bf16.mxu0 0
    %163 = vmatpush1.bf16.msra.mxu0 0
    %164 = vmatprep.subr.bf16.mxu0 0
    %165 = vmatpush1.bf16.msra.mxu0 0
    %166 = vmatprep.subr.bf16.mxu0 0
    %167 = vmatpush1.bf16.msra.mxu0 0
    %168 = vmatprep.subr.bf16.mxu0 0
    %169 = vmatpush1.bf16.msra.mxu0 0
    %170 = vmatprep.subr.bf16.mxu0 0
    %171 = vmatpush1.bf16.msra.mxu0 0
    %172 = vmatprep.mubr.bf16.mxu0 0
    %173 = vmatmul.mubr.bf16.gmra.mrb[0].mxu0 %v139
    %v174 = vpop.f32.mrb[0].mxu0
    %v175 = vadd.f32 0.0, %v174
    %v176 = vpop.f32.mrb[0].mxu0
    %v177 = vpop.f32.mrb[0].mxu0
    %v178 = vadd.f32 0.0, %v177
    %v179 = vpop.f32.mrb[0].mxu0
    %180 = vdwg.mxu0
    %vm181 = vcmask 130048
    %v182 = vsel %vm181, %v175, 0.0
    %183 = vadd.xlane.f32.xlu0 %v182
    %v184 = vpop.xlane.xlu0 %183
    %v185 = vsel %vm181, %v178, 0.0
    %186 = vadd.xlane.f32.xlu0 %v185
    %v187 = vpop.xlane.xlu0 %186
    %v188 = vadd.f32 %v184, 1.0
    %v189 = vadd.f32 %v187, 1.0
    %v190 = vrsqrt.pop %v188
    %v191 = vrsqrt.pop %v189
    %v192 = vpack.c.bf16 %v178, %v175
    %v193 = vld [vmem:[%s3] sm:$0xf]
    %v194 = vld [vmem:[%s3 + $0xa0] sm:$0x1]
    %vm195 = vcmask 31744
    %v197 = vsel %vm195, %v19, 0
    %v200 = vsel %vm195, %v20, 0
    %vm202 = vcmask 1043456
    %v204 = vsel %vm202, %v193, 0
    %206 = vmatprep.subr.mxu0 0.0
    %207 = vmatpush1.msra.mxu0 %v204
    %208 = vmatprep.subr.mxu0 0.0
    %209 = vmatpush1.msra.mxu0 0.0
    %210 = vmatprep.subr.mxu0 0.0
    %211 = vmatpush1.msra.mxu0 0.0
    %212 = vmatprep.subr.mxu0 0.0
    %213 = vmatpush1.msra.mxu0 0.0
    %214 = vmatprep.subr.mxu0 0.0
    %215 = vmatpush1.msra.mxu0 0.0
    %216 = vmatprep.subr.mxu0 0.0
    %217 = vmatpush1.msra.mxu0 0.0
    %218 = vmatprep.subr.mxu0 0.0
    %219 = vmatpush1.msra.mxu0 0.0
    %220 = vmatprep.subr.mxu0 0.0
    %221 = vmatpush1.msra.mxu0 0.0
    %222 = vmatprep.subr.mxu0 0.0
    %223 = vmatpush1.msra.mxu0 0.0
    %224 = vmatprep.subr.mxu0 0.0
    %225 = vmatpush1.msra.mxu0 0.0
    %226 = vmatprep.subr.mxu0 0.0
    %227 = vmatpush1.msra.mxu0 0.0
    %228 = vmatprep.subr.mxu0 0.0
    %229 = vmatpush1.msra.mxu0 0.0
    %230 = vmatprep.subr.mxu0 0.0
    %231 = vmatpush1.msra.mxu0 0.0
    %232 = vmatprep.subr.mxu0 0.0
    %233 = vmatpush1.msra.mxu0 0.0
    %234 = vmatprep.subr.mxu0 0.0
    %235 = vmatpush1.msra.mxu0 0.0
    %236 = vmatprep.subr.mxu0 0.0
    %237 = vmatpush1.msra.mxu0 0.0
    %238 = vmatprep.subr.mxu0 0.0
    %239 = vmatpush1.msra.mxu0 0.0
    %240 = vmatprep.subr.mxu0 0.0
    %241 = vmatpush1.msra.mxu0 0.0
    %242 = vmatprep.subr.mxu0 0.0
    %243 = vmatpush1.msra.mxu0 0.0
    %244 = vmatprep.subr.mxu0 0.0
    %245 = vmatpush1.msra.mxu0 0.0
    %246 = vmatprep.subr.mxu0 0.0
    %247 = vmatpush1.msra.mxu0 0.0
    %248 = vmatprep.subr.mxu0 0.0
    %249 = vmatpush1.msra.mxu0 0.0
    %250 = vmatprep.subr.mxu0 0.0
    %251 = vmatpush1.msra.mxu0 0.0
    %252 = vmatprep.subr.mxu0 0.0
    %253 = vmatpush1.msra.mxu0 0.0
    %254 = vmatprep.subr.mxu0 0.0
    %255 = vmatpush1.msra.mxu0 0.0
    %256 = vmatprep.subr.mxu0 0.0
    %257 = vmatpush1.msra.mxu0 0.0
    %258 = vmatprep.subr.mxu0 0.0
    %259 = vmatpush1.msra.mxu0 0.0
    %260 = vmatprep.subr.mxu0 0.0
    %261 = vmatpush1.msra.mxu0 0.0
    %262 = vmatprep.subr.mxu0 0.0
    %263 = vmatpush1.msra.mxu0 0.0
    %264 = vmatprep.subr.mxu0 0.0
    %265 = vmatpush1.msra.mxu0 0.0
    %266 = vmatprep.subr.mxu0 0.0
    %267 = vmatpush1.msra.mxu0 0.0
    %268 = vmatprep.subr.mxu0 0.0
    %269 = vmatpush1.msra.mxu0 0.0
    %270 = vmatprep.mubr.f32.mxu0 0.0
    %271 = vmatmul.mubr.f32.gmra.mrb[0].mxu0 %v197
    %v272 = vpop.f32.mrb[0].mxu0
    %v273 = vadd.f32 0.0, %v272
    %v274 = vpop.f32.mrb[0].mxu0
    %275 = vmatprep.mubr.f32.mxu0 0.0
    %276 = vmatmul.mubr.f32.gmra.mrb[0].mxu0 %v200
    %v277 = vpop.f32.mrb[0].mxu0
    %v278 = vadd.f32 0.0, %v277
    %v279 = vpop.f32.mrb[0].mxu0
    %280 = vdwg.mxu0
    %v281 = vmul.f32 %v190, %v273
    %v282 = vmul.f32 %v191, %v278
    %v283 = vpack.c.bf16 %v282, %v281
    %v285 = vsel %vm181, %v192, 0
    %287 = vmatprep.subr.bf16.mxu0 0
    %288 = vmatpush1.bf16.msra.mxu0 %v283
    %289 = vmatprep.subr.bf16.mxu0 0
    %290 = vmatpush1.bf16.msra.mxu0 0
    %291 = vmatprep.subr.bf16.mxu0 0
    %292 = vmatpush1.bf16.msra.mxu0 0
    %293 = vmatprep.subr.bf16.mxu0 0
    %294 = vmatpush1.bf16.msra.mxu0 0
    %295 = vmatprep.subr.bf16.mxu0 0
    %296 = vmatpush1.bf16.msra.mxu0 0
    %297 = vmatprep.subr.bf16.mxu0 0
    %298 = vmatpush1.bf16.msra.mxu0 0
    %299 = vmatprep.subr.bf16.mxu0 0
    %300 = vmatpush1.bf16.msra.mxu0 0
    %301 = vmatprep.subr.bf16.mxu0 0
    %302 = vmatpush1.bf16.msra.mxu0 0
    %303 = vmatprep.subr.bf16.mxu0 0
    %304 = vmatpush1.bf16.msra.mxu0 0
    %305 = vmatprep.subr.bf16.mxu0 0
    %306 = vmatpush1.bf16.msra.mxu0 0
    %307 = vmatprep.subr.bf16.mxu0 0
    %308 = vmatpush1.bf16.msra.mxu0 0
    %309 = vmatprep.subr.bf16.mxu0 0
    %310 = vmatpush1.bf16.msra.mxu0 0
    %311 = vmatprep.subr.bf16.mxu0 0
    %312 = vmatpush1.bf16.msra.mxu0 0
    %313 = vmatprep.subr.bf16.mxu0 0
    %314 = vmatpush1.bf16.msra.mxu0 0
    %315 = vmatprep.subr.bf16.mxu0 0
    %316 = vmatpush1.bf16.msra.mxu0 0
    %317 = vmatprep.subr.bf16.mxu0 0
    %318 = vmatpush1.bf16.msra.mxu0 0
    %319 = vmatprep.mubr.bf16.mxu0 0
    %320 = vmatmul.mubr.bf16.gmra.mrb[0].mxu0 %v285
    %v321 = vpop.f32.mrb[0].mxu0
    %v322 = vadd.f32 %v281, %v321
    %v323 = vpop.f32.mrb[0].mxu0
    %v324 = vpop.f32.mrb[0].mxu0
    %v325 = vadd.f32 %v282, %v324
    %v326 = vpop.f32.mrb[0].mxu0
    %327 = vdwg.mxu0
    %v328 = vmul.f32 %v190, %v322
    %v329 = vmul.f32 %v191, %v325
    %v330 = vlaneseq
    %v331 = vshrl.u32 %v330, 7
    %v332 = vsub.s32 0, %v331
    %v333 = vrot.slane %v194, %v332
    %v334 = vadd.f32 %v328, %v333
    %v335 = vadd.f32 %v329, %v333
    %v336 = vmax.f32 %v334, 0.0
    %v337 = vmax.f32 %v335, 0.0
    %v338 = vld [vmem:[%s3 + $0x8] sm:$0xff]
    %v339 = vld [vmem:[%s3 + $0x10] sm:$0xff]
    %v340 = vld [vmem:[%s3 + $0x18] sm:$0xff]
    %v341 = vld [vmem:[%s3 + $0x20] sm:$0xff]
    %v342 = vld [vmem:[%s3 + $0xa8] sm:$0x1]
    %vm343 = vcmask 261120
    %v345 = vsel %vm343, %v336, 0
    %v348 = vsel %vm343, %v337, 0
    %350 = vmatprep.subr.mxu0 0.0
    %351 = vmatpush1.msra.mxu0 %v338
    %352 = vmatprep.subr.mxu0 0.0
    %353 = vmatpush1.msra.mxu0 %v339
    %354 = vmatprep.subr.mxu0 0.0
    %355 = vmatpush1.msra.mxu0 %v340
    %356 = vmatprep.subr.mxu0 0.0
    %357 = vmatpush1.msra.mxu0 %v341
    %358 = vmatprep.subr.mxu0 0.0
    %359 = vmatpush1.msra.mxu0 0.0
    %360 = vmatprep.subr.mxu0 0.0
    %361 = vmatpush1.msra.mxu0 0.0
    %362 = vmatprep.subr.mxu0 0.0
    %363 = vmatpush1.msra.mxu0 0.0
    %364 = vmatprep.subr.mxu0 0.0
    %365 = vmatpush1.msra.mxu0 0.0
    %366 = vmatprep.subr.mxu0 0.0
    %367 = vmatpush1.msra.mxu0 0.0
    %368 = vmatprep.subr.mxu0 0.0
    %369 = vmatpush1.msra.mxu0 0.0
    %370 = vmatprep.subr.mxu0 0.0
    %371 = vmatpush1.msra.mxu0 0.0
    %372 = vmatprep.subr.mxu0 0.0
    %373 = vmatpush1.msra.mxu0 0.0
    %374 = vmatprep.subr.mxu0 0.0
    %375 = vmatpush1.msra.mxu0 0.0
    %376 = vmatprep.subr.mxu0 0.0
    %377 = vmatpush1.msra.mxu0 0.0
    %378 = vmatprep.subr.mxu0 0.0
    %379 = vmatpush1.msra.mxu0 0.0
    %380 = vmatprep.subr.mxu0 0.0
    %381 = vmatpush1.msra.mxu0 0.0
    %382 = vmatprep.subr.mxu0 0.0
    %383 = vmatpush1.msra.mxu0 0.0
    %384 = vmatprep.subr.mxu0 0.0
    %385 = vmatpush1.msra.mxu0 0.0
    %386 = vmatprep.subr.mxu0 0.0
    %387 = vmatpush1.msra.mxu0 0.0
    %388 = vmatprep.subr.mxu0 0.0
    %389 = vmatpush1.msra.mxu0 0.0
    %390 = vmatprep.subr.mxu0 0.0
    %391 = vmatpush1.msra.mxu0 0.0
    %392 = vmatprep.subr.mxu0 0.0
    %393 = vmatpush1.msra.mxu0 0.0
    %394 = vmatprep.subr.mxu0 0.0
    %395 = vmatpush1.msra.mxu0 0.0
    %396 = vmatprep.subr.mxu0 0.0
    %397 = vmatpush1.msra.mxu0 0.0
    %398 = vmatprep.subr.mxu0 0.0
    %399 = vmatpush1.msra.mxu0 0.0
    %400 = vmatprep.subr.mxu0 0.0
    %401 = vmatpush1.msra.mxu0 0.0
    %402 = vmatprep.subr.mxu0 0.0
    %403 = vmatpush1.msra.mxu0 0.0
    %404 = vmatprep.subr.mxu0 0.0
    %405 = vmatpush1.msra.mxu0 0.0
    %406 = vmatprep.subr.mxu0 0.0
    %407 = vmatpush1.msra.mxu0 0.0
    %408 = vmatprep.subr.mxu0 0.0
    %409 = vmatpush1.msra.mxu0 0.0
    %410 = vmatprep.subr.mxu0 0.0
    %411 = vmatpush1.msra.mxu0 0.0
    %412 = vmatprep.subr.mxu0 0.0
    %413 = vmatpush1.msra.mxu0 0.0
    %414 = vmatprep.mubr.f32.mxu0 0.0
    %415 = vmatmul.mubr.f32.gmra.mrb[0].mxu0 %v345
    %v416 = vpop.f32.mrb[0].mxu0
    %v417 = vadd.f32 0.0, %v416
    %v418 = vpop.f32.mrb[0].mxu0
    %419 = vmatprep.mubr.f32.mxu0 0.0
    %420 = vmatmul.mubr.f32.gmra.mrb[0].mxu0 %v348
    %v421 = vpop.f32.mrb[0].mxu0
    %v422 = vadd.f32 0.0, %v421
    %v423 = vpop.f32.mrb[0].mxu0
    %424 = vdwg.mxu0
    %v425 = vmul.f32 %v190, %v417
    %v426 = vmul.f32 %v191, %v422
    %v427 = vpack.c.bf16 %v426, %v425
    %428 = vmatprep.subr.bf16.mxu0 0
    %429 = vmatpush1.bf16.msra.mxu0 %v427
    %430 = vmatprep.subr.bf16.mxu0 0
    %431 = vmatpush1.bf16.msra.mxu0 0
    %432 = vmatprep.subr.bf16.mxu0 0
    %433 = vmatpush1.bf16.msra.mxu0 0
    %434 = vmatprep.subr.bf16.mxu0 0
    %435 = vmatpush1.bf16.msra.mxu0 0
    %436 = vmatprep.subr.bf16.mxu0 0
    %437 = vmatpush1.bf16.msra.mxu0 0
    %438 = vmatprep.subr.bf16.mxu0 0
    %439 = vmatpush1.bf16.msra.mxu0 0
    %440 = vmatprep.subr.bf16.mxu0 0
    %441 = vmatpush1.bf16.msra.mxu0 0
    %442 = vmatprep.subr.bf16.mxu0 0
    %443 = vmatpush1.bf16.msra.mxu0 0
    %444 = vmatprep.subr.bf16.mxu0 0
    %445 = vmatpush1.bf16.msra.mxu0 0
    %446 = vmatprep.subr.bf16.mxu0 0
    %447 = vmatpush1.bf16.msra.mxu0 0
    %448 = vmatprep.subr.bf16.mxu0 0
    %449 = vmatpush1.bf16.msra.mxu0 0
    %450 = vmatprep.subr.bf16.mxu0 0
    %451 = vmatpush1.bf16.msra.mxu0 0
    %452 = vmatprep.subr.bf16.mxu0 0
    %453 = vmatpush1.bf16.msra.mxu0 0
    %454 = vmatprep.subr.bf16.mxu0 0
    %455 = vmatpush1.bf16.msra.mxu0 0
    %456 = vmatprep.subr.bf16.mxu0 0
    %457 = vmatpush1.bf16.msra.mxu0 0
    %458 = vmatprep.subr.bf16.mxu0 0
    %459 = vmatpush1.bf16.msra.mxu0 0
    %460 = vmatprep.mubr.bf16.mxu0 0
    %461 = vmatmul.mubr.bf16.gmra.mrb[0].mxu0 %v285
    %v462 = vpop.f32.mrb[0].mxu0
    %v463 = vadd.f32 %v425, %v462
    %v464 = vpop.f32.mrb[0].mxu0
    %v465 = vpop.f32.mrb[0].mxu0
    %v466 = vadd.f32 %v426, %v465
    %v467 = vpop.f32.mrb[0].mxu0
    %468 = vdwg.mxu0
    %v469 = vmul.f32 %v190, %v463
    %v470 = vmul.f32 %v191, %v466
    %v471 = vlaneseq
    %v472 = vshrl.u32 %v471, 7
    %v473 = vsub.s32 0, %v472
    %v474 = vrot.slane %v342, %v473
    %v475 = vadd.f32 %v469, %v474
    %v476 = vadd.f32 %v470, %v474
    %v477 = vmax.f32 %v475, 0.0
    %v478 = vmax.f32 %v476, 0.0
    %v479 = vsel %vm343, %v477, 0.0
    %v480 = vsel %vm343, %v478, 0.0
    %v481 = vadd.f32 %v479, %v480
    %v482 = vrot.slane %v481, 4
    %v483 = vadd.f32 %v481, %v482
    %v484 = vrot.slane %v483, 2
    %v485 = vadd.f32 %v483, %v484
    %v486 = vrot.slane %v485, 1
    %v487 = vadd.f32 %v485, %v486
    %v488 = vsel %vm343, %v477, -inf
    %v489 = vsel %vm343, %v478, -inf
    %v490 = vmax.f32 %v488, %v489
    %v491 = vrot.slane %v490, 4
    %v492 = vmax.f32 %v490, %v491
    %v493 = vrot.slane %v492, 2
    %v494 = vmax.f32 %v492, %v493
    %v495 = vrot.slane %v494, 1
    %v496 = vmax.f32 %v494, %v495
    %498 = vrot.lane.b32.xlu0 %v496, 32
    %v499 = vpop.permute.xlu0 %498
    %v501 = vsel %vm343, %v487, %v499
    %v502 = vld [vmem:[%s3 + $0x28] sm:$0xff]
    %v503 = vld [vmem:[%s3 + $0x30] sm:$0xff]
    %v504 = vld [vmem:[%s3 + $0x38] sm:$0xff]
    %v505 = vld [vmem:[%s3 + $0x40] sm:$0xff]
    %v506 = vld [vmem:[%s3 + $0x48] sm:$0xff]
    %v507 = vld [vmem:[%s3 + $0x50] sm:$0xff]
    %v508 = vld [vmem:[%s3 + $0x58] sm:$0xff]
    %v509 = vld [vmem:[%s3 + $0x60] sm:$0xff]
    %v510 = vld [vmem:[%s3 + $0xb0] sm:$0x1]
    %vm511 = vcmask 523264
    %v513 = vsel %vm511, %v501, 0
    %515 = vmatprep.subr.mxu0 0.0
    %516 = vmatpush1.msra.mxu0 %v502
    %517 = vmatprep.subr.mxu0 0.0
    %518 = vmatpush1.msra.mxu0 %v503
    %519 = vmatprep.subr.mxu0 0.0
    %520 = vmatpush1.msra.mxu0 %v504
    %521 = vmatprep.subr.mxu0 0.0
    %522 = vmatpush1.msra.mxu0 %v505
    %523 = vmatprep.subr.mxu0 0.0
    %524 = vmatpush1.msra.mxu0 %v506
    %525 = vmatprep.subr.mxu0 0.0
    %526 = vmatpush1.msra.mxu0 %v507
    %527 = vmatprep.subr.mxu0 0.0
    %528 = vmatpush1.msra.mxu0 %v508
    %529 = vmatprep.subr.mxu0 0.0
    %530 = vmatpush1.msra.mxu0 %v509
    %531 = vmatprep.subr.mxu0 0.0
    %532 = vmatpush1.msra.mxu0 0.0
    %533 = vmatprep.subr.mxu0 0.0
    %534 = vmatpush1.msra.mxu0 0.0
    %535 = vmatprep.subr.mxu0 0.0
    %536 = vmatpush1.msra.mxu0 0.0
    %537 = vmatprep.subr.mxu0 0.0
    %538 = vmatpush1.msra.mxu0 0.0
    %539 = vmatprep.subr.mxu0 0.0
    %540 = vmatpush1.msra.mxu0 0.0
    %541 = vmatprep.subr.mxu0 0.0
    %542 = vmatpush1.msra.mxu0 0.0
    %543 = vmatprep.subr.mxu0 0.0
    %544 = vmatpush1.msra.mxu0 0.0
    %545 = vmatprep.subr.mxu0 0.0
    %546 = vmatpush1.msra.mxu0 0.0
    %547 = vmatprep.subr.mxu0 0.0
    %548 = vmatpush1.msra.mxu0 0.0
    %549 = vmatprep.subr.mxu0 0.0
    %550 = vmatpush1.msra.mxu0 0.0
    %551 = vmatprep.subr.mxu0 0.0
    %552 = vmatpush1.msra.mxu0 0.0
    %553 = vmatprep.subr.mxu0 0.0
    %554 = vmatpush1.msra.mxu0 0.0
    %555 = vmatprep.subr.mxu0 0.0
    %556 = vmatpush1.msra.mxu0 0.0
    %557 = vmatprep.subr.mxu0 0.0
    %558 = vmatpush1.msra.mxu0 0.0
    %559 = vmatprep.subr.mxu0 0.0
    %560 = vmatpush1.msra.mxu0 0.0
    %561 = vmatprep.subr.mxu0 0.0
    %562 = vmatpush1.msra.mxu0 0.0
    %563 = vmatprep.subr.mxu0 0.0
    %564 = vmatpush1.msra.mxu0 0.0
    %565 = vmatprep.subr.mxu0 0.0
    %566 = vmatpush1.msra.mxu0 0.0
    %567 = vmatprep.subr.mxu0 0.0
    %568 = vmatpush1.msra.mxu0 0.0
    %569 = vmatprep.subr.mxu0 0.0
    %570 = vmatpush1.msra.mxu0 0.0
    %571 = vmatprep.subr.mxu0 0.0
    %572 = vmatpush1.msra.mxu0 0.0
    %573 = vmatprep.subr.mxu0 0.0
    %574 = vmatpush1.msra.mxu0 0.0
    %575 = vmatprep.subr.mxu0 0.0
    %576 = vmatpush1.msra.mxu0 0.0
    %577 = vmatprep.subr.mxu0 0.0
    %578 = vmatpush1.msra.mxu0 0.0
    %579 = vmatprep.mubr.f32.mxu0 0.0
    %580 = vmatmul.mubr.f32.gmra.mrb[0].mxu0 %v513
    %v581 = vpop.f32.mrb[0].mxu0
    %v582 = vadd.f32 %v510, %v581
    %v583 = vpop.f32.mrb[0].mxu0
    %584 = vdwg.mxu0
    %v585 = vmax.f32 %v582, 0.0
    %v586 = vld [vmem:[%s3 + $0x68] sm:$0x1]
    %v587 = vld [vmem:[%s3 + $0xb8] sm:$0x1]
    %588 = vset.pattern.permute.xlu0 4
    %589 = vperm.xlu0 %588, %v19
    %v590 = vpop.permute.xlu0 %589
    %592 = vset.pattern.permute.xlu0 4
    %593 = vperm.xlu0 %592, %v20
    %v594 = vpop.permute.xlu0 %593
    %v596 = vlaneseq
    %v597 = vshrl.u32 %v596, 7
    %v598 = vsub.s32 0, %v597
    %v599 = vrot.slane %v586, %v598
    %v600 = vmul.f32 %v590, %v599
    %v601 = vmul.f32 %v594, %v599
    %v602 = vlaneseq
    %v603 = vshrl.u32 %v602, 7
    %v604 = vsub.s32 0, %v603
    %v605 = vrot.slane %v587, %v604
    %v606 = vadd.f32 %v600, %v605
    %v607 = vadd.f32 %v601, %v605
    %v608 = vmax.f32 %v606, 0.0
    %v609 = vmax.f32 %v607, 0.0
    %vm610 = vcmask 64512
    %v611 = vsel %vm610, %v608, 0.0
    %v612 = vsel %vm610, %v609, 0.0
    %v613 = vadd.f32 %v611, %v612
    %v614 = vrot.slane %v613, 4
    %v615 = vadd.f32 %v613, %v614
    %v616 = vrot.slane %v615, 2
    %v617 = vadd.f32 %v615, %v616
    %v618 = vrot.slane %v617, 1
    %v619 = vadd.f32 %v617, %v618
    %v620 = vmul.f32 %v619, 0.0625
    %v621 = vld [vmem:[%s3 + $0x70] sm:$0xff]
    %v622 = vld [vmem:[%s3 + $0xc0] sm:$0x1]
    %v624 = vsel %vm610, %v620, 0
    %626 = vmatprep.subr.mxu0 0.0
    %627 = vmatpush1.msra.mxu0 %v621
    %628 = vmatprep.subr.mxu0 0.0
    %629 = vmatpush1.msra.mxu0 0.0
    %630 = vmatprep.subr.mxu0 0.0
    %631 = vmatpush1.msra.mxu0 0.0
    %632 = vmatprep.subr.mxu0 0.0
    %633 = vmatpush1.msra.mxu0 0.0
    %634 = vmatprep.subr.mxu0 0.0
    %635 = vmatpush1.msra.mxu0 0.0
    %636 = vmatprep.subr.mxu0 0.0
    %637 = vmatpush1.msra.mxu0 0.0
    %638 = vmatprep.subr.mxu0 0.0
    %639 = vmatpush1.msra.mxu0 0.0
    %640 = vmatprep.subr.mxu0 0.0
    %641 = vmatpush1.msra.mxu0 0.0
    %642 = vmatprep.subr.mxu0 0.0
    %643 = vmatpush1.msra.mxu0 0.0
    %644 = vmatprep.subr.mxu0 0.0
    %645 = vmatpush1.msra.mxu0 0.0
    %646 = vmatprep.subr.mxu0 0.0
    %647 = vmatpush1.msra.mxu0 0.0
    %648 = vmatprep.subr.mxu0 0.0
    %649 = vmatpush1.msra.mxu0 0.0
    %650 = vmatprep.subr.mxu0 0.0
    %651 = vmatpush1.msra.mxu0 0.0
    %652 = vmatprep.subr.mxu0 0.0
    %653 = vmatpush1.msra.mxu0 0.0
    %654 = vmatprep.subr.mxu0 0.0
    %655 = vmatpush1.msra.mxu0 0.0
    %656 = vmatprep.subr.mxu0 0.0
    %657 = vmatpush1.msra.mxu0 0.0
    %658 = vmatprep.subr.mxu0 0.0
    %659 = vmatpush1.msra.mxu0 0.0
    %660 = vmatprep.subr.mxu0 0.0
    %661 = vmatpush1.msra.mxu0 0.0
    %662 = vmatprep.subr.mxu0 0.0
    %663 = vmatpush1.msra.mxu0 0.0
    %664 = vmatprep.subr.mxu0 0.0
    %665 = vmatpush1.msra.mxu0 0.0
    %666 = vmatprep.subr.mxu0 0.0
    %667 = vmatpush1.msra.mxu0 0.0
    %668 = vmatprep.subr.mxu0 0.0
    %669 = vmatpush1.msra.mxu0 0.0
    %670 = vmatprep.subr.mxu0 0.0
    %671 = vmatpush1.msra.mxu0 0.0
    %672 = vmatprep.subr.mxu0 0.0
    %673 = vmatpush1.msra.mxu0 0.0
    %674 = vmatprep.subr.mxu0 0.0
    %675 = vmatpush1.msra.mxu0 0.0
    %676 = vmatprep.subr.mxu0 0.0
    %677 = vmatpush1.msra.mxu0 0.0
    %678 = vmatprep.subr.mxu0 0.0
    %679 = vmatpush1.msra.mxu0 0.0
    %680 = vmatprep.subr.mxu0 0.0
    %681 = vmatpush1.msra.mxu0 0.0
    %682 = vmatprep.subr.mxu0 0.0
    %683 = vmatpush1.msra.mxu0 0.0
    %684 = vmatprep.subr.mxu0 0.0
    %685 = vmatpush1.msra.mxu0 0.0
    %686 = vmatprep.subr.mxu0 0.0
    %687 = vmatpush1.msra.mxu0 0.0
    %688 = vmatprep.subr.mxu0 0.0
    %689 = vmatpush1.msra.mxu0 0.0
    %690 = vmatprep.mubr.f32.mxu0 0.0
    %691 = vmatmul.mubr.f32.gmra.mrb[0].mxu0 %v624
    %v692 = vpop.f32.mrb[0].mxu0
    %v693 = vadd.f32 %v622, %v692
    %v694 = vpop.f32.mrb[0].mxu0
    %695 = vdwg.mxu0
    %697 = vrot.lane.b32.xlu0 %v693, 32
    %v698 = vpop.permute.xlu0 %697
    %v700 = vsel %vm343, %v585, %v698
    %v701 = vld [vmem:[%s3 + $0x78] sm:$0xff]
    %v702 = vld [vmem:[%s3 + $0x80] sm:$0xff]
    %v703 = vld [vmem:[%s3 + $0x88] sm:$0xff]
    %v704 = vld [vmem:[%s3 + $0x90] sm:$0xff]
    %v705 = vld [vmem:[%s3 + $0x98] sm:$0xff]
    %v706 = vld [vmem:[%s3 + $0xc8] sm:$0x1]
    %vm707 = vcmask 326656
    %v709 = vsel %vm707, %v700, 0
    %711 = vmatprep.subr.mxu0 0.0
    %712 = vmatpush1.msra.mxu0 %v701
    %713 = vmatprep.subr.mxu0 0.0
    %714 = vmatpush1.msra.mxu0 %v702
    %715 = vmatprep.subr.mxu0 0.0
    %716 = vmatpush1.msra.mxu0 %v703
    %717 = vmatprep.subr.mxu0 0.0
    %718 = vmatpush1.msra.mxu0 %v704
    %719 = vmatprep.subr.mxu0 0.0
    %720 = vmatpush1.msra.mxu0 %v705
    %721 = vmatprep.subr.mxu0 0.0
    %722 = vmatpush1.msra.mxu0 0.0
    %723 = vmatprep.subr.mxu0 0.0
    %724 = vmatpush1.msra.mxu0 0.0
    %725 = vmatprep.subr.mxu0 0.0
    %726 = vmatpush1.msra.mxu0 0.0
    %727 = vmatprep.subr.mxu0 0.0
    %728 = vmatpush1.msra.mxu0 0.0
    %729 = vmatprep.subr.mxu0 0.0
    %730 = vmatpush1.msra.mxu0 0.0
    %731 = vmatprep.subr.mxu0 0.0
    %732 = vmatpush1.msra.mxu0 0.0
    %733 = vmatprep.subr.mxu0 0.0
    %734 = vmatpush1.msra.mxu0 0.0
    %735 = vmatprep.subr.mxu0 0.0
    %736 = vmatpush1.msra.mxu0 0.0
    %737 = vmatprep.subr.mxu0 0.0
    %738 = vmatpush1.msra.mxu0 0.0
    %739 = vmatprep.subr.mxu0 0.0
    %740 = vmatpush1.msra.mxu0 0.0
    %741 = vmatprep.subr.mxu0 0.0
    %742 = vmatpush1.msra.mxu0 0.0
    %743 = vmatprep.subr.mxu0 0.0
    %744 = vmatpush1.msra.mxu0 0.0
    %745 = vmatprep.subr.mxu0 0.0
    %746 = vmatpush1.msra.mxu0 0.0
    %747 = vmatprep.subr.mxu0 0.0
    %748 = vmatpush1.msra.mxu0 0.0
    %749 = vmatprep.subr.mxu0 0.0
    %750 = vmatpush1.msra.mxu0 0.0
    %751 = vmatprep.subr.mxu0 0.0
    %752 = vmatpush1.msra.mxu0 0.0
    %753 = vmatprep.subr.mxu0 0.0
    %754 = vmatpush1.msra.mxu0 0.0
    %755 = vmatprep.subr.mxu0 0.0
    %756 = vmatpush1.msra.mxu0 0.0
    %757 = vmatprep.subr.mxu0 0.0
    %758 = vmatpush1.msra.mxu0 0.0
    %759 = vmatprep.subr.mxu0 0.0
    %760 = vmatpush1.msra.mxu0 0.0
    %761 = vmatprep.subr.mxu0 0.0
    %762 = vmatpush1.msra.mxu0 0.0
    %763 = vmatprep.subr.mxu0 0.0
    %764 = vmatpush1.msra.mxu0 0.0
    %765 = vmatprep.subr.mxu0 0.0
    %766 = vmatpush1.msra.mxu0 0.0
    %767 = vmatprep.subr.mxu0 0.0
    %768 = vmatpush1.msra.mxu0 0.0
    %769 = vmatprep.subr.mxu0 0.0
    %770 = vmatpush1.msra.mxu0 0.0
    %771 = vmatprep.subr.mxu0 0.0
    %772 = vmatpush1.msra.mxu0 0.0
    %773 = vmatprep.subr.mxu0 0.0
    %774 = vmatpush1.msra.mxu0 0.0
    %775 = vmatprep.mubr.f32.mxu0 0.0
    %776 = vmatmul.mubr.f32.gmra.mrb[0].mxu0 %v709
    %v777 = vpop.f32.mrb[0].mxu0
    %v778 = vadd.f32 %v706, %v777
    %v779 = vpop.f32.mrb[0].mxu0
    %780 = vdwg.mxu0
    %vm781 = vcmask 253952
    %782 = vst.msk [vmem:[#allocation2] sm:$0x1] %vm781, %v778
    // Predicated region
    $region18: #{graph_observation_extractor.1} parent=1 // pred_check
      _
    $region19: #{graph_observation_extractor.1} parent=1 // pred_check_branch
      %784 = sbr.rel (0) target = $region21
    $region20: #{graph_observation_extractor.1} parent=1 // pred_region
      %s786 = ssub.s32 16, 16
      %787 = vsyncadd [#allocation3], %s786
      %s789 = sshll.u32 [#allocation2], 4
      %s790 = int_to_ptr.vmem [resolvable:$true] %s789
      %792 = dma.vmem_to_hbm [thread:$0]  %s790, 16, %s4, [#allocation3]
    $region21: #{graph_observation_extractor.1} parent=1 // pred_fallthru
      _
    // Predicated region
    $region22: #{graph_observation_extractor.1} parent=1 // pred_check
      _
    $region23: #{graph_observation_extractor.1} parent=1 // pred_check_branch
      %794 = sbr.rel (0) target = $region25
    $region24: #{graph_observation_extractor.1} parent=1 // pred_region
      %795 = dma.done [#allocation3], 16
    $region25: #{graph_observation_extractor.1} parent=1 // pred_fallthru
      _
    %796 = vsyncpa [#allocation3], 1

</llo_original>
